<compile_context>
chip_gen: v6e
topology: v6e:2x2x1
jax: 0.10.0
libtpu: 0.0.40
codegen_flags: <defaults>
</compile_context>

<pallas_src>
import jax
import jax.numpy as jnp
from jax.experimental import pallas as pl
from jax.experimental.pallas import tpu as pltpu


def _rev_matrix(n, dtype):
    # Anti-diagonal permutation matrix R with R[i, j] = 1 iff i + j == n - 1.
    i = jax.lax.broadcasted_iota(jnp.int32, (n, n), 0)
    j = jax.lax.broadcasted_iota(jnp.int32, (n, n), 1)
    return ((i + j) == (n - 1)).astype(dtype)


def _make_kernel(rot, n_c, acc_dtype):
    # `rot` must be static: torch.rot90 changes the output shape (H<->W).
    def kernel(perm_b_ref, perm_t_ref, ml_ref, mr_ref, x_ref, o_ref):
        del perm_b_ref, perm_t_ref            # consumed by the index_maps only
        ml = ml_ref[...]                      # (H, H) left  permutation (or I)
        mr = mr_ref[...]                      # (W, W) right permutation (or I)
        for c in range(n_c):                  # static unroll over channels
            x = x_ref[c]                      # (H, W) slab, original dtype
            # flip_h (if drawn):   R_H @ x        -- exact 0/1 permutation matmul
            y = jnp.dot(ml, x, preferred_element_type=acc_dtype).astype(x.dtype)
            # flip_w / rot column reverse (composed host-side):  y @ M_right
            y = jnp.dot(y, mr, preferred_element_type=acc_dtype)
            if rot:                           # rot90 = column-reverse then transpose
                y = y.T                       # minor-dim transpose (XLU)
            o_ref[c] = y.astype(o_ref.dtype)
    return kernel


def random_cloud_generator(cloud, key):
    """Pallas equivalent of RandomCloudGenerator.forward(cloud)."""
    B, C, T, H, W = cloud.shape
    kb, kt, k3, k4, k5 = jax.random.split(key, 5)

    # torch.randperm over batch and time dims (applied via index_map).
    perm_b = jax.random.permutation(kb, B).astype(jnp.int32)
    perm_t = jax.random.permutation(kt, T).astype(jnp.int32)

    # torch.rand(1) > 0.5 coin flips.  flip_h / flip_w stay on-device (traced);
    # only `rot` must be concretized host-side because it changes output shape.
    flip_h = jax.random.uniform(k3, ()) > 0.5
    flip_w = jax.random.uniform(k4, ()) > 0.5
    rot = bool(jax.random.uniform(k5, ()) > 0.5)

    out_h, out_w = (W, H) if rot else (H, W)

    if jnp.issubdtype(cloud.dtype, jnp.floating):
        m_dtype, acc_dtype = cloud.dtype, jnp.float32
    else:
        # TODO(synk): integer clouds use the int MXU path (fine on v5e/v6e);
        # v7x has no int MXU — a lane/sublane-reverse path would be needed.
        m_dtype, acc_dtype = cloud.dtype, jnp.int32

    # Data-dependent flip matrices, built ONCE outside the grid loop.
    rev_h, eye_h = _rev_matrix(H, m_dtype), jnp.eye(H, dtype=m_dtype)
    rev_w, eye_w = _rev_matrix(W, m_dtype), jnp.eye(W, dtype=m_dtype)
    m_left = jnp.where(flip_h, rev_h, eye_h)
    if rot:
        # (x @ R_W?) @ R_W : the two column reverses cancel when flip_w is set.
        m_right = jnp.where(flip_w, eye_w, rev_w)
    else:
        m_right = jnp.where(flip_w, rev_w, eye_w)

    # Batch / time permutations via scalar-prefetched tables in the index_map.
    cloud_spec = pl.BlockSpec(
        (None, C, None, H, W),
        lambda b, t, pb, pt: (pb[b], 0, pt[t], 0, 0))
    ml_spec = pl.BlockSpec((H, H), lambda b, t, pb, pt: (0, 0))   # resident
    mr_spec = pl.BlockSpec((W, W), lambda b, t, pb, pt: (0, 0))   # resident
    out_spec = pl.BlockSpec(
        (None, C, None, out_h, out_w),
        lambda b, t, pb, pt: (b, 0, t, 0, 0))

    block_bytes = C * H * W * cloud.dtype.itemsize
    mat_bytes = (H * H + W * W) * jnp.dtype(m_dtype).itemsize
    need = 4 * block_bytes + 4 * mat_bytes + (2 << 20)   # 2x double-buffered in/out
    vmem_limit = int(min(48 << 20, max(16 << 20, need)))

    call = pl.pallas_call(
        _make_kernel(rot, C, acc_dtype),
        out_shape=jax.ShapeDtypeStruct((B, C, T, out_h, out_w), cloud.dtype),
        grid_spec=pltpu.PrefetchScalarGridSpec(
            num_scalar_prefetch=2,
            grid=(B, T),
            in_specs=[ml_spec, mr_spec, cloud_spec],
            out_specs=out_spec),
        compiler_params=pltpu.CompilerParams(
            dimension_semantics=("parallel", "parallel"),
            vmem_limit_bytes=vmem_limit),
    )
    out = call(perm_b, perm_t, m_left, m_right, cloud)
    return out, (perm_b, perm_t, flip_h, flip_w, rot)


def _reference(cloud, perm_b, perm_t, flip_h, flip_w, rot):
    # Pure-JAX reference reproducing the PyTorch forward with the same draws.
    out = cloud[perm_b][:, :, perm_t]
    if flip_h:
        out = jnp.flip(out, axis=3)
    if flip_w:
        out = jnp.flip(out, axis=4)
    if rot:
        out = jnp.rot90(out, 1, axes=(3, 4))
    return out


if __name__ == "__main__":
    key = jax.random.PRNGKey(0)
    data_key, aug_key = jax.random.split(key)

    # Small demo shapes; spatial = 128 keeps the in-kernel transpose / matmul
    # lane-aligned on TPU.
    B, C, T, H, W = 4, 2, 6, 128, 128
    cloud = jax.random.normal(data_key, (B, C, T, H, W), dtype=jnp.float32)

    out, (pb, pt, fh, fw, rot) = random_cloud_generator(cloud, aug_key)
    out = jax.block_until_ready(out)

    ref = _reference(cloud, pb, pt, bool(fh), bool(fw), rot)
    assert out.shape == ref.shape, (out.shape, ref.shape)
    assert bool(jnp.allclose(out, ref, atol=1e-6, rtol=1e-6))

    print("KERNEL_OK")
</pallas_src>

<mosaic_0001>
module attributes {stable_mosaic.version = 11 : i64} {
  func.func @kernel(%arg0: i32, %arg1: i32, %arg2: memref<4xi32, #tpu.memory_space<smem>>, %arg3: memref<6xi32, #tpu.memory_space<smem>>, %arg4: memref<128x128xf32, #tpu.memory_space<vmem>>, %arg5: memref<128x128xf32, #tpu.memory_space<vmem>>, %arg6: memref<1x2x1x128x128xf32, #tpu.memory_space<vmem>>, %arg7: memref<1x2x1x128x128xf32, #tpu.memory_space<vmem>>) attributes {dimension_semantics = [#tpu.dimension_semantics<parallel>, #tpu.dimension_semantics<parallel>], iteration_bounds = array<i64: 4, 6>, scalar_prefetch = 2 : i64, scratch_operands = 0 : i64, tpu.core_type = #tpu.core_type<tc>, window_params = [{pipeline_mode = #tpu.pipeline_mode<synchronous>, transform_indices = @transform_0, window_bounds = array<i64: 128, 128>}, {pipeline_mode = #tpu.pipeline_mode<synchronous>, transform_indices = @transform_1, window_bounds = array<i64: 128, 128>}, {transform_indices = @transform_2, window_bounds = array<i64: 1, 2, 1, 128, 128>}, {transform_indices = @transform_3, window_bounds = array<i64: 1, 2, 1, 128, 128>}]} {
    %c0 = arith.constant 0 : index
    %c0_0 = arith.constant 0 : index
    %0 = vector.load %arg4[%c0, %c0_0] : memref<128x128xf32, #tpu.memory_space<vmem>>, vector<128x128xf32>
    %c0_1 = arith.constant 0 : index
    %c0_2 = arith.constant 0 : index
    %1 = vector.load %arg5[%c0_1, %c0_2] : memref<128x128xf32, #tpu.memory_space<vmem>>, vector<128x128xf32>
    %c0_3 = arith.constant 0 : index
    %c0_4 = arith.constant 0 : index
    %c0_5 = arith.constant 0 : index
    %c0_6 = arith.constant 0 : index
    %c0_7 = arith.constant 0 : index
    %2 = vector.load %arg6[%c0_3, %c0_4, %c0_5, %c0_6, %c0_7] : memref<1x2x1x128x128xf32, #tpu.memory_space<vmem>>, vector<1x1x1x128x128xf32>
    %3 = vector.shape_cast %2 : vector<1x1x1x128x128xf32> to vector<128x128xf32>
    %cst = arith.constant dense<0.000000e+00> : vector<128x128xf32>
    %4 = tpu.matmul %0, %3, %cst {dimension_numbers = #tpu.dot_dimension_numbers<[1], [0], [0], [1], [0, 0, 1, 1], [], []>} : vector<128x128xf32>, vector<128x128xf32>, vector<128x128xf32> -> vector<128x128xf32>
    %cst_8 = arith.constant dense<0.000000e+00> : vector<128x128xf32>
    %5 = tpu.matmul %4, %1, %cst_8 {dimension_numbers = #tpu.dot_dimension_numbers<[1], [0], [0], [1], [0, 0, 1, 1], [], []>} : vector<128x128xf32>, vector<128x128xf32>, vector<128x128xf32> -> vector<128x128xf32>
    %6 = tpu.transpose %5, [1, 0] : vector<128x128xf32> -> vector<128x128xf32>
    %c0_9 = arith.constant 0 : index
    %c0_10 = arith.constant 0 : index
    %c0_11 = arith.constant 0 : index
    %c0_12 = arith.constant 0 : index
    %c0_13 = arith.constant 0 : index
    %7 = vector.load %arg7[%c0_9, %c0_10, %c0_11, %c0_12, %c0_13] : memref<1x2x1x128x128xf32, #tpu.memory_space<vmem>>, vector<1x1x1x128x128xf32>
    %8 = vector.shape_cast %7 : vector<1x1x1x128x128xf32> to vector<128x128xf32>
    %9 = vector.shape_cast %6 : vector<128x128xf32> to vector<1x1x1x128x128xf32>
    tpu.vector_store %arg7[%c0_9, %c0_10, %c0_11, %c0_12, %c0_13], %9 {strides = array<i32>} : memref<1x2x1x128x128xf32, #tpu.memory_space<vmem>>, vector<1x1x1x128x128xf32>,
    %c0_14 = arith.constant 0 : index
    %c1 = arith.constant 1 : index
    %c0_15 = arith.constant 0 : index
    %c0_16 = arith.constant 0 : index
    %c0_17 = arith.constant 0 : index
    %10 = vector.load %arg6[%c0_14, %c1, %c0_15, %c0_16, %c0_17] : memref<1x2x1x128x128xf32, #tpu.memory_space<vmem>>, vector<1x1x1x128x128xf32>
    %11 = vector.shape_cast %10 : vector<1x1x1x128x128xf32> to vector<128x128xf32>
    %cst_18 = arith.constant dense<0.000000e+00> : vector<128x128xf32>
    %12 = tpu.matmul %0, %11, %cst_18 {dimension_numbers = #tpu.dot_dimension_numbers<[1], [0], [0], [1], [0, 0, 1, 1], [], []>} : vector<128x128xf32>, vector<128x128xf32>, vector<128x128xf32> -> vector<128x128xf32>
    %cst_19 = arith.constant dense<0.000000e+00> : vector<128x128xf32>
    %13 = tpu.matmul %12, %1, %cst_19 {dimension_numbers = #tpu.dot_dimension_numbers<[1], [0], [0], [1], [0, 0, 1, 1], [], []>} : vector<128x128xf32>, vector<128x128xf32>, vector<128x128xf32> -> vector<128x128xf32>
    %14 = tpu.transpose %13, [1, 0] : vector<128x128xf32> -> vector<128x128xf32>
    %c0_20 = arith.constant 0 : index
    %c1_21 = arith.constant 1 : index
    %c0_22 = arith.constant 0 : index
    %c0_23 = arith.constant 0 : index
    %c0_24 = arith.constant 0 : index
    %15 = vector.load %arg7[%c0_20, %c1_21, %c0_22, %c0_23, %c0_24] : memref<1x2x1x128x128xf32, #tpu.memory_space<vmem>>, vector<1x1x1x128x128xf32>
    %16 = vector.shape_cast %15 : vector<1x1x1x128x128xf32> to vector<128x128xf32>
    %17 = vector.shape_cast %14 : vector<128x128xf32> to vector<1x1x1x128x128xf32>
    tpu.vector_store %arg7[%c0_20, %c1_21, %c0_22, %c0_23, %c0_24], %17 {strides = array<i32>} : memref<1x2x1x128x128xf32, #tpu.memory_space<vmem>>, vector<1x1x1x128x128xf32>,
    return
  }
  func.func @transform_0(%arg0: i32, %arg1: i32, %arg2: memref<4xi32, #tpu.memory_space<smem>>, %arg3: memref<6xi32, #tpu.memory_space<smem>>) -> (i32, i32) {
    %c0_i32 = arith.constant 0 : i32
    %c0_i32_0 = arith.constant 0 : i32
    %c0_i32_1 = arith.constant 0 : i32
    return %c0_i32, %c0_i32_0 : i32, i32
  }
  func.func @transform_1(%arg0: i32, %arg1: i32, %arg2: memref<4xi32, #tpu.memory_space<smem>>, %arg3: memref<6xi32, #tpu.memory_space<smem>>) -> (i32, i32) {
    %c0_i32 = arith.constant 0 : i32
    %c0_i32_0 = arith.constant 0 : i32
    %c0_i32_1 = arith.constant 0 : i32
    return %c0_i32, %c0_i32_0 : i32, i32
  }
  func.func @transform_2(%arg0: i32, %arg1: i32, %arg2: memref<4xi32, #tpu.memory_space<smem>>, %arg3: memref<6xi32, #tpu.memory_space<smem>>) -> (i32, i32, i32, i32, i32) {
    %0 = arith.index_cast %arg0 : i32 to index
    %1 = memref.load %arg2[%0] : memref<4xi32, #tpu.memory_space<smem>>
    %2 = arith.index_cast %arg1 : i32 to index
    %3 = memref.load %arg3[%2] : memref<6xi32, #tpu.memory_space<smem>>
    %c0_i32 = arith.constant 0 : i32
    %c0_i32_0 = arith.constant 0 : i32
    %c0_i32_1 = arith.constant 0 : i32
    %c0_i32_2 = arith.constant 0 : i32
    return %1, %c0_i32, %3, %c0_i32_0, %c0_i32_1 : i32, i32, i32, i32, i32
  }
  func.func @transform_3(%arg0: i32, %arg1: i32, %arg2: memref<4xi32, #tpu.memory_space<smem>>, %arg3: memref<6xi32, #tpu.memory_space<smem>>) -> (i32, i32, i32, i32, i32) {
    %c0_i32 = arith.constant 0 : i32
    %c0_i32_0 = arith.constant 0 : i32
    %c0_i32_1 = arith.constant 0 : i32
    %c0_i32_2 = arith.constant 0 : i32
    return %arg0, %c0_i32, %arg1, %c0_i32_0, %c0_i32_1 : i32, i32, i32, i32, i32
  }
}

</mosaic_0001>

<llo_original>
// kernel: tpu_custom_call.1
$region0: #{tpu_custom_call.1}
  #allocation0 [shape = 'u32[]', space=smem, size = 0x4, offset = 0x4, fixed_abs, tag = 'smem constant byte address 0x4 - core index']
  #allocation1 [shape = 'u32[144,128]{1,0:T(1,128)}', space=vmem, size = 0x12000, scoped, tag = 'internal scratch']
  #allocation2 [shape = 's32[1]{0}', space=sflag, size = 0x4, scoped, tag = 'scoped memory for tpu_custom_call.1']
  #allocation3 [shape = 'u8[512]{0}', space=smem, size = 0x200, scoped, tag = 'prefetched SMEM operand 0']
  #allocation4 [shape = 'u8[512]{0}', space=smem, size = 0x200, scoped, tag = 'prefetched SMEM operand 1']
  #allocation12 [shape = 's32[]', space=sflag, size = 0x4, offset = 0, fixed_abs, tag = 'sflag constant byte address 0x0 - dummy sync flag']
  #allocation14 [shape = 's32[]', space=sflag, size = 0x4, offset = 0, fixed_abs, tag = 'sflag constant byte address 0x0 - dummy sync flag']
  %s0 = inlined_call_operand.hbm [shape: s32[4], index: 0, kind: input, shape index: {}]
  %s1 = inlined_call_operand.hbm [shape: s32[6], index: 1, kind: input, shape index: {}]
  %s2 = inlined_call_operand.hbm [shape: f32[128,128], index: 2, kind: input, shape index: {}]
  %s3 = inlined_call_operand.hbm [shape: f32[128,128], index: 3, kind: input, shape index: {}]
  %s4 = inlined_call_operand.hbm [shape: f32[4,2,6,128,128], index: 4, kind: input, shape index: {}]
  %s5 = inlined_call_operand.hbm [shape: f32[4,2,6,128,128], index: 5, kind: output, shape index: {}]
  %s6 = sld [smem:[#allocation0]]
  $region57: #{tpu_custom_call.1} parent=0
    _
  %s8 = ssub.s32 1, %s6
  %s9 = scalar_select 0, %s8, %s6
  %11 = dma.hbm_to_smem %s0, 16, [#allocation3], [#allocation2]
  %13 = dma.hbm_to_smem %s1, 16, [#allocation4], [#allocation2]
  %14 = dma.done [#allocation2], 32
  %15 = sfence
  $region1: #{tpu_custom_call.1} parent=0
    #allocation5 [shape = 'u8[65536]{0}', space=vmem, size = 0x10000, scoped, tag = 'input window, operand 2, single buffered']
    #allocation6 [shape = 's32[2]{0}', space=sflag, size = 0x8, scoped, tag = 'scoped memory for tpu_custom_call.1']
    #allocation7 [shape = 's32[2]{0}', space=sflag, size = 0x8, scoped, tag = 'scoped memory for tpu_custom_call.1']
    #allocation8 [shape = 'u8[65536]{0}', space=vmem, size = 0x10000, scoped, tag = 'input window, operand 3, single buffered']
    #allocation9 [shape = 's32[1]{0}', space=sflag, size = 0x4, scoped, tag = 'scoped memory for tpu_custom_call.1']
    #allocation10 [shape = 'u8[262144]{0}', space=vmem, size = 0x40000, scoped, tag = 'input window, operand 4']
    #allocation11 [shape = 'u8[262144]{0}', space=vmem, size = 0x40000, scoped, tag = 'output window, operand 0']
    %16 = vsyncpa [#allocation6], 0
    %17 = vsyncpa [#allocation9], 0
    %18 = vsyncpa [#allocation7], 0
    %s19 = scalar_lea.sflag [#allocation7], 1
    %20 = vsyncpa %s19, 0
    loop: start=0, step=1, limit=26
    $region2: #{tpu_custom_call.1} parent=1 // loop_pre_header
      _
    $region3: #{tpu_custom_call.1} parent=1 // loop_header
      %s22 = sphi 0, %s26
      %p23 = scmp.ge.s32.totalorder %s22, 26
      %s29 = sphi 0, %s41
      %s30 = sphi 0, %s37
      %s31 = sphi 0, %s29
      %s32 = sphi 0, %s30
      %s33 = sphi 0, %s31
      %s34 = sphi 0, %s32
      %s42 = sphi 0, %s42
      %s44 = sphi 0, %s42
      %s45 = sphi 0, %s44
      %s59 = sphi 0, %s45
      %s63 = sphi 0, %s63
      %s65 = sphi 0, %s63
      %s66 = sphi 0, %s65
      %s80 = sphi 0, %s66
      %s92 = sphi 0, %s94
      %s95 = sphi 0, %s92
      %s96 = sphi 0, %s95
      %s112 = sphi 0, %s96
      %s120 = sphi 0, %s122
      %s123 = sphi 0, %s120
      %s124 = sphi 0, %s123
      %s140 = sphi 0, %s124
    $region4: #{tpu_custom_call.1} parent=1 // loop_header_branch
      %25 = sbr.rel (%p23) target = $region8
    $region5: #{tpu_custom_call.1} parent=1 // loop_body
      %s27 = ssub.s32 %s22, 1
      %s28 = ssub.s32 %s22, 2
      %s35 = sadd.s32 1, %s30
      %p36 = scmp.ge.s32.totalorder %s35, 6
      %s37 = scalar_select %p36, 0, %s35
      %s38 = sadd.s32 1, %s29
      %s39 = scalar_select %p36, %s38, %s29
      %p40 = scmp.ge.s32.totalorder %s39, 4
      %s41 = scalar_select %p40, 0, %s39
      %s43 = sadd.s32 %s42, 1
      %p46 = scmp.eq.s32.totalorder %s22, 23
      %p47 = scmp.ne.s32.totalorder %s42, %s44
      %p48 = scmp.eq.s32.totalorder %s22, 0
      %p49 = por %p47, %p48
      %p50 = scmp.ne.s32.totalorder %s42, %s44
      %p51 = scmp.eq.s32.totalorder %s27, 23
      %p52 = por %p50, %p51
      %p53 = scmp.ne.s32.totalorder %s44, %s45
      %p54 = scmp.eq.s32.totalorder %s27, 0
      %p55 = por %p53, %p54
      %p56 = scmp.ne.s32.totalorder %s44, %s45
      %p57 = scmp.eq.s32.totalorder %s28, 23
      %p58 = por %p56, %p57
      %p60 = scmp.ne.s32.totalorder %s45, %s59
      %p61 = scmp.eq.s32.totalorder %s28, 0
      %p62 = por %p60, %p61
      %s64 = sadd.s32 %s63, 1
      %p67 = scmp.eq.s32.totalorder %s22, 23
      %p68 = scmp.ne.s32.totalorder %s63, %s65
      %p69 = scmp.eq.s32.totalorder %s22, 0
      %p70 = por %p68, %p69
      %p71 = scmp.ne.s32.totalorder %s63, %s65
      %p72 = scmp.eq.s32.totalorder %s27, 23
      %p73 = por %p71, %p72
      %p74 = scmp.ne.s32.totalorder %s65, %s66
      %p75 = scmp.eq.s32.totalorder %s27, 0
      %p76 = por %p74, %p75
      %p77 = scmp.ne.s32.totalorder %s65, %s66
      %p78 = scmp.eq.s32.totalorder %s28, 23
      %p79 = por %p77, %p78
      %p81 = scmp.ne.s32.totalorder %s66, %s80
      %p82 = scmp.eq.s32.totalorder %s28, 0
      %p83 = por %p81, %p82
      %s84 = sld [smem:[#allocation3 + %s29]]
      %s85 = sld [smem:[#allocation4 + %s30]]
      %s86 = sld [smem:[#allocation3 + %s41]]
      %s87 = sld [smem:[#allocation4 + %s37]]
      %s88 = ssub.s32 %s84, %s86
      %s89 = ssub.s32 %s85, %s87
      %s90 = sor.u32 %s88, %s89
      %p91 = scmp.eq.s32.totalorder %s90, 0
      %s93 = sadd.s32 %s92, 1
      %s94 = scalar_select %p91, %s92, %s93
      %p97 = pneg %p91
      %p98 = scmp.eq.s32.totalorder %s22, 23
      %p99 = por %p97, %p98
      %p100 = scmp.ne.s32.totalorder %s92, %s95
      %p101 = scmp.eq.s32.totalorder %s22, 0
      %p102 = por %p100, %p101
      %p103 = scmp.ne.s32.totalorder %s92, %s95
      %p104 = scmp.eq.s32.totalorder %s27, 23
      %p105 = por %p103, %p104
      %p106 = scmp.ne.s32.totalorder %s95, %s96
      %p107 = scmp.eq.s32.totalorder %s27, 0
      %p108 = por %p106, %p107
      %p109 = scmp.ne.s32.totalorder %s95, %s96
      %p110 = scmp.eq.s32.totalorder %s28, 23
      %p111 = por %p109, %p110
      %p113 = scmp.ne.s32.totalorder %s96, %s112
      %p114 = scmp.eq.s32.totalorder %s28, 0
      %p115 = por %p113, %p114
      %s116 = ssub.s32 %s29, %s41
      %s117 = ssub.s32 %s30, %s37
      %s118 = sor.u32 %s116, %s117
      %p119 = scmp.eq.s32.totalorder %s118, 0
      %s121 = sadd.s32 %s120, 1
      %s122 = scalar_select %p119, %s120, %s121
      %p125 = pneg %p119
      %p126 = scmp.eq.s32.totalorder %s22, 23
      %p127 = por %p125, %p126
      %p128 = scmp.ne.s32.totalorder %s120, %s123
      %p129 = scmp.eq.s32.totalorder %s22, 0
      %p130 = por %p128, %p129
      %p131 = scmp.ne.s32.totalorder %s120, %s123
      %p132 = scmp.eq.s32.totalorder %s27, 23
      %p133 = por %p131, %p132
      %p134 = scmp.ne.s32.totalorder %s123, %s124
      %p135 = scmp.eq.s32.totalorder %s27, 0
      %p136 = por %p134, %p135
      %p137 = scmp.ne.s32.totalorder %s123, %s124
      %p138 = scmp.eq.s32.totalorder %s28, 23
      %p139 = por %p137, %p138
      %p141 = scmp.ne.s32.totalorder %s124, %s140
      %p142 = scmp.eq.s32.totalorder %s28, 0
      %p143 = por %p141, %p142
      %p144 = scmp.le.s32.totalorder 1, %s22
      %p145 = scmp.lt.s32.totalorder %s22, 25
      %p146 = pnand %p144, %p145
      %p147 = pneg %p146
      // Predicated region
      $region9: #{tpu_custom_call.1} parent=5 // pred_check
        _
      $region10: #{tpu_custom_call.1} parent=5 // pred_check_branch
        %149 = sbr.rel (%p146) target = $region12
      $region11: #{tpu_custom_call.1} parent=5 // pred_region
        %s150 = ssub.s32 %s22, 1
        // Predicated region
        $region13: #{tpu_custom_call.1} parent=11 // pred_check
          %p151 = pneg %p55
        $region14: #{tpu_custom_call.1} parent=11 // pred_check_branch
          %153 = sbr.rel (%p151) target = $region16
        $region15: #{tpu_custom_call.1} parent=11 // pred_region
          %s155 = ssub.s32 2048, 2048
          %156 = vsyncadd [#allocation6], %s155
          %s157 = sshll.u32 [#allocation5], 4
          %s158 = int_to_ptr.vmem [resolvable:$true] %s157
          %163 = dma.hbm_to_vmem [thread:$0]  %s2, 2048, %s158, [#allocation6], 128, 128, 8
        $region16: #{tpu_custom_call.1} parent=11 // pred_fallthru
          _
        // Predicated region
        $region17: #{tpu_custom_call.1} parent=11 // pred_check
          %p164 = pneg %p76
        $region18: #{tpu_custom_call.1} parent=11 // pred_check_branch
          %166 = sbr.rel (%p164) target = $region20
        $region19: #{tpu_custom_call.1} parent=11 // pred_region
          %s168 = ssub.s32 2048, 2048
          %169 = vsyncadd [#allocation9], %s168
          %s170 = sshll.u32 [#allocation8], 4
          %s171 = int_to_ptr.vmem [resolvable:$true] %s170
          %176 = dma.hbm_to_vmem [thread:$0]  %s3, 2048, %s171, [#allocation9], 128, 128, 8
        $region20: #{tpu_custom_call.1} parent=11 // pred_fallthru
          _
      $region12: #{tpu_custom_call.1} parent=5 // pred_fallthru
        _
      %p177 = scmp.lt.s32.totalorder %s22, 24
      // Predicated region
      $region21: #{tpu_custom_call.1} parent=5 // pred_check
        %p178 = pneg %p177
      $region22: #{tpu_custom_call.1} parent=5 // pred_check_branch
        %180 = sbr.rel (%p178) target = $region24
      $region23: #{tpu_custom_call.1} parent=5 // pred_region
        // Predicated region
        $region25: #{tpu_custom_call.1} parent=23 // pred_check
          %p181 = pneg %p102
        $region26: #{tpu_custom_call.1} parent=23 // pred_check_branch
          %183 = sbr.rel (%p181) target = $region28
        $region27: #{tpu_custom_call.1} parent=23 // pred_region
          #allocation13 [shape = 'u32[6]{0}', space=smem, size = 0x18, scoped, tag = 'DMA stride descriptor']
          %s184 = sand.u32 %s22, 1
          %s185 = scalar_lea.sflag [#allocation6], %s184
          %s186 = sand.u32 %s92, 1
          %s187 = smul.addr %s186, 256
          %s188 = scalar_lea.vmem [#allocation10], %s187
          %s189 = sld [smem:[#allocation3 + %s29]]
          %s190 = sld [smem:[#allocation4 + %s30]]
          %s192 = ssub.s32 4096, 4096
          %193 = vsyncadd %s185, %s192
          %s194 = smul.addr %s190, 16
          %s195 = smul.addr %s189, 192
          %s196 = sadd.s32 %s194, %s195
          %s197 = smul.addr %s196, 128
          %s198 = scalar_lea.hbm %s4, %s197
          %s200 = sshll.u32 1, 14
          %s201 = sxor.u32 4294967295, %s200
          %s203 = sld [smem:[#allocation0]]
          %s204 = sadd.s32 2, %s203
          %s206 = sshll.u32 7, 26
          %s207 = sxor.u32 4294967295, %s206
          %s208 = sand.u32 0, %s207
          %s209 = sshll.u32 %s204, 26
          %s210 = sor.u32 %s208, %s209
          %s211 = sshll.u32 %s188, 4
          %s212 = int_to_ptr.vmem [resolvable:$true] %s211
          %218 = sst [smem:[#allocation13]] 12288
          %s219 = scalar_lea.smem [#allocation13], 1
          %220 = sst [smem:[%s219]] 2048
          %s221 = scalar_lea.smem [#allocation13], 2
          %222 = sst [smem:[%s221]] 16
          %s223 = scalar_lea.smem [#allocation13], 3
          %224 = sst [smem:[%s223]] 128
          %s225 = scalar_lea.smem [#allocation13], 4
          %226 = sst [smem:[%s225]] 128
          %s227 = scalar_lea.smem [#allocation13], 5
          %228 = sst [smem:[%s227]] 8
          %230 = dma.general %s198, 4096, %s212, %s185, 131072, [#allocation13], %s210, 0
        $region28: #{tpu_custom_call.1} parent=23 // pred_fallthru
          _
      $region24: #{tpu_custom_call.1} parent=5 // pred_fallthru
        _
      %p231 = scmp.le.s32.totalorder 1, %s22
      %p232 = scmp.lt.s32.totalorder %s22, 25
      %p233 = pnand %p231, %p232
      %p234 = pneg %p233
      // Predicated region
      $region29: #{tpu_custom_call.1} parent=5 // pred_check
        _
      $region30: #{tpu_custom_call.1} parent=5 // pred_check_branch
        %236 = sbr.rel (%p233) target = $region32
      $region31: #{tpu_custom_call.1} parent=5 // pred_region
        %s237 = ssub.s32 %s22, 1
        // Predicated region
        $region33: #{tpu_custom_call.1} parent=31 // pred_check
          %p238 = pneg %p55
        $region34: #{tpu_custom_call.1} parent=31 // pred_check_branch
          %240 = sbr.rel (%p238) target = $region36
        $region35: #{tpu_custom_call.1} parent=31 // pred_region
          %241 = dma.done [#allocation6], 2048
        $region36: #{tpu_custom_call.1} parent=31 // pred_fallthru
          _
        // Predicated region
        $region37: #{tpu_custom_call.1} parent=31 // pred_check
          %p242 = pneg %p76
        $region38: #{tpu_custom_call.1} parent=31 // pred_check_branch
          %244 = sbr.rel (%p242) target = $region40
        $region39: #{tpu_custom_call.1} parent=31 // pred_region
          %245 = dma.done [#allocation9], 2048
        $region40: #{tpu_custom_call.1} parent=31 // pred_fallthru
          _
        %s246 = sand.u32 %s27, 1
        %s247 = scalar_lea.sflag [#allocation6], %s246
        %s248 = sand.u32 %s95, 1
        %s249 = smul.addr %s248, 256
        %s250 = scalar_lea.vmem [#allocation10], %s249
        // Predicated region
        $region41: #{tpu_custom_call.1} parent=31 // pred_check
          %p251 = pneg %p108
        $region42: #{tpu_custom_call.1} parent=31 // pred_check_branch
          %253 = sbr.rel (%p251) target = $region44
        $region43: #{tpu_custom_call.1} parent=31 // pred_region
          %254 = dma.done %s247, 4096
        $region44: #{tpu_custom_call.1} parent=31 // pred_fallthru
          _
        %p255 = pneg %p55
        %p256 = pneg %p52
        %p257 = pneg %p76
        %p258 = pneg %p73
        %s259 = sand.u32 %s27, 1
        %s260 = scalar_lea.sflag [#allocation6], %s259
        %s261 = sand.u32 %s95, 1
        %s262 = smul.addr %s261, 256
        %s263 = scalar_lea.vmem [#allocation10], %s262
        %p264 = pneg %p108
        %p265 = pneg %p105
        %p266 = pneg %p136
        %p267 = pneg %p133
        %s268 = sand.u32 %s123, 1
        %s269 = scalar_lea.sflag [#allocation7], %s268
        %s270 = sand.u32 %s123, 1
        %s271 = smul.addr %s270, 256
        %s272 = scalar_lea.vmem [#allocation11], %s271
        %s273 = sld [smem:[#allocation3 + %s31]]
        %s274 = sld [smem:[#allocation4 + %s32]]
        %v275 = vld [vmem:[#allocation5] sm:$0xff]
        %v276 = vld [vmem:[#allocation5 + $0x8] sm:$0xff]
        %v277 = vld [vmem:[#allocation5 + $0x10] sm:$0xff]
        %v278 = vld [vmem:[#allocation5 + $0x18] sm:$0xff]
        %v279 = vld [vmem:[#allocation5 + $0x20] sm:$0xff]
        %v280 = vld [vmem:[#allocation5 + $0x28] sm:$0xff]
        %v281 = vld [vmem:[#allocation5 + $0x30] sm:$0xff]
        %v282 = vld [vmem:[#allocation5 + $0x38] sm:$0xff]
        %v283 = vld [vmem:[#allocation5 + $0x40] sm:$0xff]
        %v284 = vld [vmem:[#allocation5 + $0x48] sm:$0xff]
        %v285 = vld [vmem:[#allocation5 + $0x50] sm:$0xff]
        %v286 = vld [vmem:[#allocation5 + $0x58] sm:$0xff]
        %v287 = vld [vmem:[#allocation5 + $0x60] sm:$0xff]
        %v288 = vld [vmem:[#allocation5 + $0x68] sm:$0xff]
        %v289 = vld [vmem:[#allocation5 + $0x70] sm:$0xff]
        %v290 = vld [vmem:[#allocation5 + $0x78] sm:$0xff]
        %v291 = vld [vmem:[#allocation8] sm:$0xff]
        %v292 = vld [vmem:[#allocation8 + $0x8] sm:$0xff]
        %v293 = vld [vmem:[#allocation8 + $0x10] sm:$0xff]
        %v294 = vld [vmem:[#allocation8 + $0x18] sm:$0xff]
        %v295 = vld [vmem:[#allocation8 + $0x20] sm:$0xff]
        %v296 = vld [vmem:[#allocation8 + $0x28] sm:$0xff]
        %v297 = vld [vmem:[#allocation8 + $0x30] sm:$0xff]
        %v298 = vld [vmem:[#allocation8 + $0x38] sm:$0xff]
        %v299 = vld [vmem:[#allocation8 + $0x40] sm:$0xff]
        %v300 = vld [vmem:[#allocation8 + $0x48] sm:$0xff]
        %v301 = vld [vmem:[#allocation8 + $0x50] sm:$0xff]
        %v302 = vld [vmem:[#allocation8 + $0x58] sm:$0xff]
        %v303 = vld [vmem:[#allocation8 + $0x60] sm:$0xff]
        %v304 = vld [vmem:[#allocation8 + $0x68] sm:$0xff]
        %v305 = vld [vmem:[#allocation8 + $0x70] sm:$0xff]
        %v306 = vld [vmem:[#allocation8 + $0x78] sm:$0xff]
        %v307 = vld [vmem:[%s250] sm:$0xff]
        %v308 = vld [vmem:[%s250 + $0x8] sm:$0xff]
        %v309 = vld [vmem:[%s250 + $0x10] sm:$0xff]
        %v310 = vld [vmem:[%s250 + $0x18] sm:$0xff]
        %v311 = vld [vmem:[%s250 + $0x20] sm:$0xff]
        %v312 = vld [vmem:[%s250 + $0x28] sm:$0xff]
        %v313 = vld [vmem:[%s250 + $0x30] sm:$0xff]
        %v314 = vld [vmem:[%s250 + $0x38] sm:$0xff]
        %v315 = vld [vmem:[%s250 + $0x40] sm:$0xff]
        %v316 = vld [vmem:[%s250 + $0x48] sm:$0xff]
        %v317 = vld [vmem:[%s250 + $0x50] sm:$0xff]
        %v318 = vld [vmem:[%s250 + $0x58] sm:$0xff]
        %v319 = vld [vmem:[%s250 + $0x60] sm:$0xff]
        %v320 = vld [vmem:[%s250 + $0x68] sm:$0xff]
        %v321 = vld [vmem:[%s250 + $0x70] sm:$0xff]
        %v322 = vld [vmem:[%s250 + $0x78] sm:$0xff]
        %323 = vmatprep.subr.mxu0 0.0
        %324 = vmatpush1.msra.mxu0 %v322
        %325 = vmatprep.subr.mxu0 0.0
        %326 = vmatpush1.msra.mxu0 %v321
        %327 = vmatprep.subr.mxu0 0.0
        %328 = vmatpush1.msra.mxu0 %v320
        %329 = vmatprep.subr.mxu0 0.0
        %330 = vmatpush1.msra.mxu0 %v319
        %331 = vmatprep.subr.mxu0 0.0
        %332 = vmatpush1.msra.mxu0 %v318
        %333 = vmatprep.subr.mxu0 0.0
        %334 = vmatpush1.msra.mxu0 %v317
        %335 = vmatprep.subr.mxu0 0.0
        %336 = vmatpush1.msra.mxu0 %v316
        %337 = vmatprep.subr.mxu0 0.0
        %338 = vmatpush1.msra.mxu0 %v315
        %339 = vmatprep.subr.mxu0 0.0
        %340 = vmatpush1.msra.mxu0 %v314
        %341 = vmatprep.subr.mxu0 0.0
        %342 = vmatpush1.msra.mxu0 %v313
        %343 = vmatprep.subr.mxu0 0.0
        %344 = vmatpush1.msra.mxu0 %v312
        %345 = vmatprep.subr.mxu0 0.0
        %346 = vmatpush1.msra.mxu0 %v311
        %347 = vmatprep.subr.mxu0 0.0
        %348 = vmatpush1.msra.mxu0 %v310
        %349 = vmatprep.subr.mxu0 0.0
        %350 = vmatpush1.msra.mxu0 %v309
        %351 = vmatprep.subr.mxu0 0.0
        %352 = vmatpush1.msra.mxu0 %v308
        %353 = vmatprep.subr.mxu0 0.0
        %354 = vmatpush1.msra.mxu0 %v307
        %355 = vmatprep.subr.mxu0 0.0
        %356 = vmatpush2.msra.mxu0 0.0
        %357 = vmatprep.subr.mxu0 0.0
        %358 = vmatpush2.msra.mxu0 0.0
        %359 = vmatprep.subr.mxu0 0.0
        %360 = vmatpush2.msra.mxu0 0.0
        %361 = vmatprep.subr.mxu0 0.0
        %362 = vmatpush2.msra.mxu0 0.0
        %363 = vmatprep.subr.mxu0 0.0
        %364 = vmatpush2.msra.mxu0 0.0
        %365 = vmatprep.subr.mxu0 0.0
        %366 = vmatpush2.msra.mxu0 0.0
        %367 = vmatprep.subr.mxu0 0.0
        %368 = vmatpush2.msra.mxu0 0.0
        %369 = vmatprep.subr.mxu0 0.0
        %370 = vmatpush2.msra.mxu0 0.0
        %371 = vmatprep.subr.mxu0 0.0
        %372 = vmatpush2.msra.mxu0 0.0
        %373 = vmatprep.subr.mxu0 0.0
        %374 = vmatpush2.msra.mxu0 0.0
        %375 = vmatprep.subr.mxu0 0.0
        %376 = vmatpush2.msra.mxu0 0.0
        %377 = vmatprep.subr.mxu0 0.0
        %378 = vmatpush2.msra.mxu0 0.0
        %379 = vmatprep.subr.mxu0 0.0
        %380 = vmatpush2.msra.mxu0 0.0
        %381 = vmatprep.subr.mxu0 0.0
        %382 = vmatpush2.msra.mxu0 0.0
        %383 = vmatprep.subr.mxu0 0.0
        %384 = vmatpush2.msra.mxu0 0.0
        %385 = vmatprep.subr.mxu0 0.0
        %386 = vmatpush2.msra.mxu0 0.0
        %387 = vmatprep.mubr.f32.mxu0 0.0
        %388 = vmatmul.mubr.f32.gmra.mxu0 %v275
        %v389 = vpop.f32.mrf.mxu0
        %v390 = vadd.f32 0.0, %v389
        %v391 = vpop.f32.mrf.mxu0
        %392 = vmatprep.mubr.f32.mxu0 0.0
        %393 = vmatmul.mubr.f32.gmra.mxu0 %v276
        %v394 = vpop.f32.mrf.mxu0
        %v395 = vadd.f32 0.0, %v394
        %v396 = vpop.f32.mrf.mxu0
        %397 = vmatprep.mubr.f32.mxu0 0.0
        %398 = vmatmul.mubr.f32.gmra.mxu0 %v277
        %v399 = vpop.f32.mrf.mxu0
        %v400 = vadd.f32 0.0, %v399
        %v401 = vpop.f32.mrf.mxu0
        %402 = vmatprep.mubr.f32.mxu0 0.0
        %403 = vmatmul.mubr.f32.gmra.mxu0 %v278
        %v404 = vpop.f32.mrf.mxu0
        %v405 = vadd.f32 0.0, %v404
        %v406 = vpop.f32.mrf.mxu0
        %407 = vmatprep.mubr.f32.mxu0 0.0
        %408 = vmatmul.mubr.f32.gmra.mxu0 %v279
        %v409 = vpop.f32.mrf.mxu0
        %v410 = vadd.f32 0.0, %v409
        %v411 = vpop.f32.mrf.mxu0
        %412 = vmatprep.mubr.f32.mxu0 0.0
        %413 = vmatmul.mubr.f32.gmra.mxu0 %v280
        %v414 = vpop.f32.mrf.mxu0
        %v415 = vadd.f32 0.0, %v414
        %v416 = vpop.f32.mrf.mxu0
        %417 = vmatprep.mubr.f32.mxu0 0.0
        %418 = vmatmul.mubr.f32.gmra.mxu0 %v281
        %v419 = vpop.f32.mrf.mxu0
        %v420 = vadd.f32 0.0, %v419
        %v421 = vpop.f32.mrf.mxu0
        %422 = vmatprep.mubr.f32.mxu0 0.0
        %423 = vmatmul.mubr.f32.gmra.mxu0 %v282
        %v424 = vpop.f32.mrf.mxu0
        %v425 = vadd.f32 0.0, %v424
        %v426 = vpop.f32.mrf.mxu0
        %427 = vmatprep.mubr.f32.mxu0 0.0
        %428 = vmatmul.mubr.f32.gmra.mxu0 %v283
        %v429 = vpop.f32.mrf.mxu0
        %v430 = vadd.f32 0.0, %v429
        %v431 = vpop.f32.mrf.mxu0
        %432 = vmatprep.mubr.f32.mxu0 0.0
        %433 = vmatmul.mubr.f32.gmra.mxu0 %v284
        %v434 = vpop.f32.mrf.mxu0
        %v435 = vadd.f32 0.0, %v434
        %v436 = vpop.f32.mrf.mxu0
        %437 = vmatprep.mubr.f32.mxu0 0.0
        %438 = vmatmul.mubr.f32.gmra.mxu0 %v285
        %v439 = vpop.f32.mrf.mxu0
        %v440 = vadd.f32 0.0, %v439
        %v441 = vpop.f32.mrf.mxu0
        %442 = vmatprep.mubr.f32.mxu0 0.0
        %443 = vmatmul.mubr.f32.gmra.mxu0 %v286
        %v444 = vpop.f32.mrf.mxu0
        %v445 = vadd.f32 0.0, %v444
        %v446 = vpop.f32.mrf.mxu0
        %447 = vmatprep.mubr.f32.mxu0 0.0
        %448 = vmatmul.mubr.f32.gmra.mxu0 %v287
        %v449 = vpop.f32.mrf.mxu0
        %v450 = vadd.f32 0.0, %v449
        %v451 = vpop.f32.mrf.mxu0
        %452 = vmatprep.mubr.f32.mxu0 0.0
        %453 = vmatmul.mubr.f32.gmra.mxu0 %v288
        %v454 = vpop.f32.mrf.mxu0
        %v455 = vadd.f32 0.0, %v454
        %v456 = vpop.f32.mrf.mxu0
        %457 = vmatprep.mubr.f32.mxu0 0.0
        %458 = vmatmul.mubr.f32.gmra.mxu0 %v289
        %v459 = vpop.f32.mrf.mxu0
        %v460 = vadd.f32 0.0, %v459
        %v461 = vpop.f32.mrf.mxu0
        %462 = vmatprep.mubr.f32.mxu0 0.0
        %463 = vmatmul.mubr.f32.gmra.mxu0 %v290
        %v464 = vpop.f32.mrf.mxu0
        %v465 = vadd.f32 0.0, %v464
        %v466 = vpop.f32.mrf.mxu0
        %467 = vdwg.mxu0
        %468 = vmatprep.subr.mxu0 0.0
        %469 = vmatpush1.msra.mxu0 %v306
        %470 = vmatprep.subr.mxu0 0.0
        %471 = vmatpush1.msra.mxu0 %v305
        %472 = vmatprep.subr.mxu0 0.0
        %473 = vmatpush1.msra.mxu0 %v304
        %474 = vmatprep.subr.mxu0 0.0
        %475 = vmatpush1.msra.mxu0 %v303
        %476 = vmatprep.subr.mxu0 0.0
        %477 = vmatpush1.msra.mxu0 %v302
        %478 = vmatprep.subr.mxu0 0.0
        %479 = vmatpush1.msra.mxu0 %v301
        %480 = vmatprep.subr.mxu0 0.0
        %481 = vmatpush1.msra.mxu0 %v300
        %482 = vmatprep.subr.mxu0 0.0
        %483 = vmatpush1.msra.mxu0 %v299
        %484 = vmatprep.subr.mxu0 0.0
        %485 = vmatpush1.msra.mxu0 %v298
        %486 = vmatprep.subr.mxu0 0.0
        %487 = vmatpush1.msra.mxu0 %v297
        %488 = vmatprep.subr.mxu0 0.0
        %489 = vmatpush1.msra.mxu0 %v296
        %490 = vmatprep.subr.mxu0 0.0
        %491 = vmatpush1.msra.mxu0 %v295
        %492 = vmatprep.subr.mxu0 0.0
        %493 = vmatpush1.msra.mxu0 %v294
        %494 = vmatprep.subr.mxu0 0.0
        %495 = vmatpush1.msra.mxu0 %v293
        %496 = vmatprep.subr.mxu0 0.0
        %497 = vmatpush1.msra.mxu0 %v292
        %498 = vmatprep.subr.mxu0 0.0
        %499 = vmatpush1.msra.mxu0 %v291
        %500 = vmatprep.subr.mxu0 0.0
        %501 = vmatpush2.msra.mxu0 0.0
        %502 = vmatprep.subr.mxu0 0.0
        %503 = vmatpush2.msra.mxu0 0.0
        %504 = vmatprep.subr.mxu0 0.0
        %505 = vmatpush2.msra.mxu0 0.0
        %506 = vmatprep.subr.mxu0 0.0
        %507 = vmatpush2.msra.mxu0 0.0
        %508 = vmatprep.subr.mxu0 0.0
        %509 = vmatpush2.msra.mxu0 0.0
        %510 = vmatprep.subr.mxu0 0.0
        %511 = vmatpush2.msra.mxu0 0.0
        %512 = vmatprep.subr.mxu0 0.0
        %513 = vmatpush2.msra.mxu0 0.0
        %514 = vmatprep.subr.mxu0 0.0
        %515 = vmatpush2.msra.mxu0 0.0
        %516 = vmatprep.subr.mxu0 0.0
        %517 = vmatpush2.msra.mxu0 0.0
        %518 = vmatprep.subr.mxu0 0.0
        %519 = vmatpush2.msra.mxu0 0.0
        %520 = vmatprep.subr.mxu0 0.0
        %521 = vmatpush2.msra.mxu0 0.0
        %522 = vmatprep.subr.mxu0 0.0
        %523 = vmatpush2.msra.mxu0 0.0
        %524 = vmatprep.subr.mxu0 0.0
        %525 = vmatpush2.msra.mxu0 0.0
        %526 = vmatprep.subr.mxu0 0.0
        %527 = vmatpush2.msra.mxu0 0.0
        %528 = vmatprep.subr.mxu0 0.0
        %529 = vmatpush2.msra.mxu0 0.0
        %530 = vmatprep.subr.mxu0 0.0
        %531 = vmatpush2.msra.mxu0 0.0
        %532 = vmatprep.mubr.f32.mxu0 0.0
        %533 = vmatmul.mubr.f32.gmra.mxu0 %v390
        %v534 = vpop.f32.mrf.mxu0
        %v535 = vadd.f32 0.0, %v534
        %v536 = vpop.f32.mrf.mxu0
        %537 = vmatprep.mubr.f32.mxu0 0.0
        %538 = vmatmul.mubr.f32.gmra.mxu0 %v395
        %v539 = vpop.f32.mrf.mxu0
        %v540 = vadd.f32 0.0, %v539
        %v541 = vpop.f32.mrf.mxu0
        %542 = vmatprep.mubr.f32.mxu0 0.0
        %543 = vmatmul.mubr.f32.gmra.mxu0 %v400
        %v544 = vpop.f32.mrf.mxu0
        %v545 = vadd.f32 0.0, %v544
        %v546 = vpop.f32.mrf.mxu0
        %547 = vmatprep.mubr.f32.mxu0 0.0
        %548 = vmatmul.mubr.f32.gmra.mxu0 %v405
        %v549 = vpop.f32.mrf.mxu0
        %v550 = vadd.f32 0.0, %v549
        %v551 = vpop.f32.mrf.mxu0
        %552 = vmatprep.mubr.f32.mxu0 0.0
        %553 = vmatmul.mubr.f32.gmra.mxu0 %v410
        %v554 = vpop.f32.mrf.mxu0
        %v555 = vadd.f32 0.0, %v554
        %v556 = vpop.f32.mrf.mxu0
        %557 = vmatprep.mubr.f32.mxu0 0.0
        %558 = vmatmul.mubr.f32.gmra.mxu0 %v415
        %v559 = vpop.f32.mrf.mxu0
        %v560 = vadd.f32 0.0, %v559
        %v561 = vpop.f32.mrf.mxu0
        %562 = vmatprep.mubr.f32.mxu0 0.0
        %563 = vmatmul.mubr.f32.gmra.mxu0 %v420
        %v564 = vpop.f32.mrf.mxu0
        %v565 = vadd.f32 0.0, %v564
        %v566 = vpop.f32.mrf.mxu0
        %567 = vmatprep.mubr.f32.mxu0 0.0
        %568 = vmatmul.mubr.f32.gmra.mxu0 %v425
        %v569 = vpop.f32.mrf.mxu0
        %v570 = vadd.f32 0.0, %v569
        %v571 = vpop.f32.mrf.mxu0
        %572 = vmatprep.mubr.f32.mxu0 0.0
        %573 = vmatmul.mubr.f32.gmra.mxu0 %v430
        %v574 = vpop.f32.mrf.mxu0
        %v575 = vadd.f32 0.0, %v574
        %v576 = vpop.f32.mrf.mxu0
        %577 = vmatprep.mubr.f32.mxu0 0.0
        %578 = vmatmul.mubr.f32.gmra.mxu0 %v435
        %v579 = vpop.f32.mrf.mxu0
        %v580 = vadd.f32 0.0, %v579
        %v581 = vpop.f32.mrf.mxu0
        %582 = vmatprep.mubr.f32.mxu0 0.0
        %583 = vmatmul.mubr.f32.gmra.mxu0 %v440
        %v584 = vpop.f32.mrf.mxu0
        %v585 = vadd.f32 0.0, %v584
        %v586 = vpop.f32.mrf.mxu0
        %587 = vmatprep.mubr.f32.mxu0 0.0
        %588 = vmatmul.mubr.f32.gmra.mxu0 %v445
        %v589 = vpop.f32.mrf.mxu0
        %v590 = vadd.f32 0.0, %v589
        %v591 = vpop.f32.mrf.mxu0
        %592 = vmatprep.mubr.f32.mxu0 0.0
        %593 = vmatmul.mubr.f32.gmra.mxu0 %v450
        %v594 = vpop.f32.mrf.mxu0
        %v595 = vadd.f32 0.0, %v594
        %v596 = vpop.f32.mrf.mxu0
        %597 = vmatprep.mubr.f32.mxu0 0.0
        %598 = vmatmul.mubr.f32.gmra.mxu0 %v455
        %v599 = vpop.f32.mrf.mxu0
        %v600 = vadd.f32 0.0, %v599
        %v601 = vpop.f32.mrf.mxu0
        %602 = vmatprep.mubr.f32.mxu0 0.0
        %603 = vmatmul.mubr.f32.gmra.mxu0 %v460
        %v604 = vpop.f32.mrf.mxu0
        %v605 = vadd.f32 0.0, %v604
        %v606 = vpop.f32.mrf.mxu0
        %607 = vmatprep.mubr.f32.mxu0 0.0
        %608 = vmatmul.mubr.f32.gmra.mxu0 %v465
        %v609 = vpop.f32.mrf.mxu0
        %v610 = vadd.f32 0.0, %v609
        %v611 = vpop.f32.mrf.mxu0
        %612 = vdwg.mxu0
        %613 = vxpose.xlu0.b32.start [1/16] %v535, 128
        %614 = vxpose.xlu0.b32.cont [2/16] %v540, 128
        %615 = vxpose.xlu0.b32.cont [3/16] %v545, 128
        %616 = vxpose.xlu0.b32.cont [4/16] %v550, 128
        %617 = vxpose.xlu0.b32.cont [5/16] %v555, 128
        %618 = vxpose.xlu0.b32.cont [6/16] %v560, 128
        %619 = vxpose.xlu0.b32.cont [7/16] %v565, 128
        %620 = vxpose.xlu0.b32.cont [8/16] %v570, 128
        %621 = vxpose.xlu0.b32.cont [9/16] %v575, 128
        %622 = vxpose.xlu0.b32.cont [10/16] %v580, 128
        %623 = vxpose.xlu0.b32.cont [11/16] %v585, 128
        %624 = vxpose.xlu0.b32.cont [12/16] %v590, 128
        %625 = vxpose.xlu0.b32.cont [13/16] %v595, 128
        %626 = vxpose.xlu0.b32.cont [14/16] %v600, 128
        %627 = vxpose.xlu0.b32.cont [15/16] %v605, 128
        %628 = vxpose.xlu0.b32.end [16/16] %v610, 128
        %v629 = vpop.trf.xlu0
        %v630 = vpop.trf.xlu0
        %v631 = vpop.trf.xlu0
        %v632 = vpop.trf.xlu0
        %v633 = vpop.trf.xlu0
        %v634 = vpop.trf.xlu0
        %v635 = vpop.trf.xlu0
        %v636 = vpop.trf.xlu0
        %v637 = vpop.trf.xlu0
        %v638 = vpop.trf.xlu0
        %v639 = vpop.trf.xlu0
        %v640 = vpop.trf.xlu0
        %v641 = vpop.trf.xlu0
        %v642 = vpop.trf.xlu0
        %v643 = vpop.trf.xlu0
        %v644 = vpop.trf.xlu0
        %645 = vst [vmem:[%s272] sm:$0xff] %v629
        %646 = vst [vmem:[%s272 + $0x8] sm:$0xff] %v630
        %647 = vst [vmem:[%s272 + $0x10] sm:$0xff] %v631
        %648 = vst [vmem:[%s272 + $0x18] sm:$0xff] %v632
        %649 = vst [vmem:[%s272 + $0x20] sm:$0xff] %v633
        %650 = vst [vmem:[%s272 + $0x28] sm:$0xff] %v634
        %651 = vst [vmem:[%s272 + $0x30] sm:$0xff] %v635
        %652 = vst [vmem:[%s272 + $0x38] sm:$0xff] %v636
        %653 = vst [vmem:[%s272 + $0x40] sm:$0xff] %v637
        %654 = vst [vmem:[%s272 + $0x48] sm:$0xff] %v638
        %655 = vst [vmem:[%s272 + $0x50] sm:$0xff] %v639
        %656 = vst [vmem:[%s272 + $0x58] sm:$0xff] %v640
        %657 = vst [vmem:[%s272 + $0x60] sm:$0xff] %v641
        %658 = vst [vmem:[%s272 + $0x68] sm:$0xff] %v642
        %659 = vst [vmem:[%s272 + $0x70] sm:$0xff] %v643
        %660 = vst [vmem:[%s272 + $0x78] sm:$0xff] %v644
        %s661 = scalar_lea.vmem %s250, 128 [#allocation10]
        %v662 = vld [vmem:[%s661] sm:$0xff]
        %v663 = vld [vmem:[%s661 + $0x8] sm:$0xff]
        %v664 = vld [vmem:[%s661 + $0x10] sm:$0xff]
        %v665 = vld [vmem:[%s661 + $0x18] sm:$0xff]
        %v666 = vld [vmem:[%s661 + $0x20] sm:$0xff]
        %v667 = vld [vmem:[%s661 + $0x28] sm:$0xff]
        %v668 = vld [vmem:[%s661 + $0x30] sm:$0xff]
        %v669 = vld [vmem:[%s661 + $0x38] sm:$0xff]
        %v670 = vld [vmem:[%s661 + $0x40] sm:$0xff]
        %v671 = vld [vmem:[%s661 + $0x48] sm:$0xff]
        %v672 = vld [vmem:[%s661 + $0x50] sm:$0xff]
        %v673 = vld [vmem:[%s661 + $0x58] sm:$0xff]
        %v674 = vld [vmem:[%s661 + $0x60] sm:$0xff]
        %v675 = vld [vmem:[%s661 + $0x68] sm:$0xff]
        %v676 = vld [vmem:[%s661 + $0x70] sm:$0xff]
        %v677 = vld [vmem:[%s661 + $0x78] sm:$0xff]
        %678 = vmatprep.subr.mxu0 0.0
        %679 = vmatpush1.msra.mxu0 %v677
        %680 = vmatprep.subr.mxu0 0.0
        %681 = vmatpush1.msra.mxu0 %v676
        %682 = vmatprep.subr.mxu0 0.0
        %683 = vmatpush1.msra.mxu0 %v675
        %684 = vmatprep.subr.mxu0 0.0
        %685 = vmatpush1.msra.mxu0 %v674
        %686 = vmatprep.subr.mxu0 0.0
        %687 = vmatpush1.msra.mxu0 %v673
        %688 = vmatprep.subr.mxu0 0.0
        %689 = vmatpush1.msra.mxu0 %v672
        %690 = vmatprep.subr.mxu0 0.0
        %691 = vmatpush1.msra.mxu0 %v671
        %692 = vmatprep.subr.mxu0 0.0
        %693 = vmatpush1.msra.mxu0 %v670
        %694 = vmatprep.subr.mxu0 0.0
        %695 = vmatpush1.msra.mxu0 %v669
        %696 = vmatprep.subr.mxu0 0.0
        %697 = vmatpush1.msra.mxu0 %v668
        %698 = vmatprep.subr.mxu0 0.0
        %699 = vmatpush1.msra.mxu0 %v667
        %700 = vmatprep.subr.mxu0 0.0
        %701 = vmatpush1.msra.mxu0 %v666
        %702 = vmatprep.subr.mxu0 0.0
        %703 = vmatpush1.msra.mxu0 %v665
        %704 = vmatprep.subr.mxu0 0.0
        %705 = vmatpush1.msra.mxu0 %v664
        %706 = vmatprep.subr.mxu0 0.0
        %707 = vmatpush1.msra.mxu0 %v663
        %708 = vmatprep.subr.mxu0 0.0
        %709 = vmatpush1.msra.mxu0 %v662
        %710 = vmatprep.subr.mxu0 0.0
        %711 = vmatpush2.msra.mxu0 0.0
        %712 = vmatprep.subr.mxu0 0.0
        %713 = vmatpush2.msra.mxu0 0.0
        %714 = vmatprep.subr.mxu0 0.0
        %715 = vmatpush2.msra.mxu0 0.0
        %716 = vmatprep.subr.mxu0 0.0
        %717 = vmatpush2.msra.mxu0 0.0
        %718 = vmatprep.subr.mxu0 0.0
        %719 = vmatpush2.msra.mxu0 0.0
        %720 = vmatprep.subr.mxu0 0.0
        %721 = vmatpush2.msra.mxu0 0.0
        %722 = vmatprep.subr.mxu0 0.0
        %723 = vmatpush2.msra.mxu0 0.0
        %724 = vmatprep.subr.mxu0 0.0
        %725 = vmatpush2.msra.mxu0 0.0
        %726 = vmatprep.subr.mxu0 0.0
        %727 = vmatpush2.msra.mxu0 0.0
        %728 = vmatprep.subr.mxu0 0.0
        %729 = vmatpush2.msra.mxu0 0.0
        %730 = vmatprep.subr.mxu0 0.0
        %731 = vmatpush2.msra.mxu0 0.0
        %732 = vmatprep.subr.mxu0 0.0
        %733 = vmatpush2.msra.mxu0 0.0
        %734 = vmatprep.subr.mxu0 0.0
        %735 = vmatpush2.msra.mxu0 0.0
        %736 = vmatprep.subr.mxu0 0.0
        %737 = vmatpush2.msra.mxu0 0.0
        %738 = vmatprep.subr.mxu0 0.0
        %739 = vmatpush2.msra.mxu0 0.0
        %740 = vmatprep.subr.mxu0 0.0
        %741 = vmatpush2.msra.mxu0 0.0
        %742 = vmatprep.mubr.f32.mxu0 0.0
        %743 = vmatmul.mubr.f32.gmra.mxu0 %v275
        %v744 = vpop.f32.mrf.mxu0
        %v745 = vadd.f32 0.0, %v744
        %v746 = vpop.f32.mrf.mxu0
        %747 = vmatprep.mubr.f32.mxu0 0.0
        %748 = vmatmul.mubr.f32.gmra.mxu0 %v276
        %v749 = vpop.f32.mrf.mxu0
        %v750 = vadd.f32 0.0, %v749
        %v751 = vpop.f32.mrf.mxu0
        %752 = vmatprep.mubr.f32.mxu0 0.0
        %753 = vmatmul.mubr.f32.gmra.mxu0 %v277
        %v754 = vpop.f32.mrf.mxu0
        %v755 = vadd.f32 0.0, %v754
        %v756 = vpop.f32.mrf.mxu0
        %757 = vmatprep.mubr.f32.mxu0 0.0
        %758 = vmatmul.mubr.f32.gmra.mxu0 %v278
        %v759 = vpop.f32.mrf.mxu0
        %v760 = vadd.f32 0.0, %v759
        %v761 = vpop.f32.mrf.mxu0
        %762 = vmatprep.mubr.f32.mxu0 0.0
        %763 = vmatmul.mubr.f32.gmra.mxu0 %v279
        %v764 = vpop.f32.mrf.mxu0
        %v765 = vadd.f32 0.0, %v764
        %v766 = vpop.f32.mrf.mxu0
        %767 = vmatprep.mubr.f32.mxu0 0.0
        %768 = vmatmul.mubr.f32.gmra.mxu0 %v280
        %v769 = vpop.f32.mrf.mxu0
        %v770 = vadd.f32 0.0, %v769
        %v771 = vpop.f32.mrf.mxu0
        %772 = vmatprep.mubr.f32.mxu0 0.0
        %773 = vmatmul.mubr.f32.gmra.mxu0 %v281
        %v774 = vpop.f32.mrf.mxu0
        %v775 = vadd.f32 0.0, %v774
        %v776 = vpop.f32.mrf.mxu0
        %777 = vmatprep.mubr.f32.mxu0 0.0
        %778 = vmatmul.mubr.f32.gmra.mxu0 %v282
        %v779 = vpop.f32.mrf.mxu0
        %v780 = vadd.f32 0.0, %v779
        %v781 = vpop.f32.mrf.mxu0
        %782 = vmatprep.mubr.f32.mxu0 0.0
        %783 = vmatmul.mubr.f32.gmra.mxu0 %v283
        %v784 = vpop.f32.mrf.mxu0
        %v785 = vadd.f32 0.0, %v784
        %v786 = vpop.f32.mrf.mxu0
        %787 = vmatprep.mubr.f32.mxu0 0.0
        %788 = vmatmul.mubr.f32.gmra.mxu0 %v284
        %v789 = vpop.f32.mrf.mxu0
        %v790 = vadd.f32 0.0, %v789
        %v791 = vpop.f32.mrf.mxu0
        %792 = vmatprep.mubr.f32.mxu0 0.0
        %793 = vmatmul.mubr.f32.gmra.mxu0 %v285
        %v794 = vpop.f32.mrf.mxu0
        %v795 = vadd.f32 0.0, %v794
        %v796 = vpop.f32.mrf.mxu0
        %797 = vmatprep.mubr.f32.mxu0 0.0
        %798 = vmatmul.mubr.f32.gmra.mxu0 %v286
        %v799 = vpop.f32.mrf.mxu0
        %v800 = vadd.f32 0.0, %v799
        %v801 = vpop.f32.mrf.mxu0
        %802 = vmatprep.mubr.f32.mxu0 0.0
        %803 = vmatmul.mubr.f32.gmra.mxu0 %v287
        %v804 = vpop.f32.mrf.mxu0
        %v805 = vadd.f32 0.0, %v804
        %v806 = vpop.f32.mrf.mxu0
        %807 = vmatprep.mubr.f32.mxu0 0.0
        %808 = vmatmul.mubr.f32.gmra.mxu0 %v288
        %v809 = vpop.f32.mrf.mxu0
        %v810 = vadd.f32 0.0, %v809
        %v811 = vpop.f32.mrf.mxu0
        %812 = vmatprep.mubr.f32.mxu0 0.0
        %813 = vmatmul.mubr.f32.gmra.mxu0 %v289
        %v814 = vpop.f32.mrf.mxu0
        %v815 = vadd.f32 0.0, %v814
        %v816 = vpop.f32.mrf.mxu0
        %817 = vmatprep.mubr.f32.mxu0 0.0
        %818 = vmatmul.mubr.f32.gmra.mxu0 %v290
        %v819 = vpop.f32.mrf.mxu0
        %v820 = vadd.f32 0.0, %v819
        %v821 = vpop.f32.mrf.mxu0
        %822 = vdwg.mxu0
        %823 = vmatprep.subr.mxu0 0.0
        %824 = vmatpush1.msra.mxu0 %v306
        %825 = vmatprep.subr.mxu0 0.0
        %826 = vmatpush1.msra.mxu0 %v305
        %827 = vmatprep.subr.mxu0 0.0
        %828 = vmatpush1.msra.mxu0 %v304
        %829 = vmatprep.subr.mxu0 0.0
        %830 = vmatpush1.msra.mxu0 %v303
        %831 = vmatprep.subr.mxu0 0.0
        %832 = vmatpush1.msra.mxu0 %v302
        %833 = vmatprep.subr.mxu0 0.0
        %834 = vmatpush1.msra.mxu0 %v301
        %835 = vmatprep.subr.mxu0 0.0
        %836 = vmatpush1.msra.mxu0 %v300
        %837 = vmatprep.subr.mxu0 0.0
        %838 = vmatpush1.msra.mxu0 %v299
        %839 = vmatprep.subr.mxu0 0.0
        %840 = vmatpush1.msra.mxu0 %v298
        %841 = vmatprep.subr.mxu0 0.0
        %842 = vmatpush1.msra.mxu0 %v297
        %843 = vmatprep.subr.mxu0 0.0
        %844 = vmatpush1.msra.mxu0 %v296
        %845 = vmatprep.subr.mxu0 0.0
        %846 = vmatpush1.msra.mxu0 %v295
        %847 = vmatprep.subr.mxu0 0.0
        %848 = vmatpush1.msra.mxu0 %v294
        %849 = vmatprep.subr.mxu0 0.0
        %850 = vmatpush1.msra.mxu0 %v293
        %851 = vmatprep.subr.mxu0 0.0
        %852 = vmatpush1.msra.mxu0 %v292
        %853 = vmatprep.subr.mxu0 0.0
        %854 = vmatpush1.msra.mxu0 %v291
        %855 = vmatprep.subr.mxu0 0.0
        %856 = vmatpush2.msra.mxu0 0.0
        %857 = vmatprep.subr.mxu0 0.0
        %858 = vmatpush2.msra.mxu0 0.0
        %859 = vmatprep.subr.mxu0 0.0
        %860 = vmatpush2.msra.mxu0 0.0
        %861 = vmatprep.subr.mxu0 0.0
        %862 = vmatpush2.msra.mxu0 0.0
        %863 = vmatprep.subr.mxu0 0.0
        %864 = vmatpush2.msra.mxu0 0.0
        %865 = vmatprep.subr.mxu0 0.0
        %866 = vmatpush2.msra.mxu0 0.0
        %867 = vmatprep.subr.mxu0 0.0
        %868 = vmatpush2.msra.mxu0 0.0
        %869 = vmatprep.subr.mxu0 0.0
        %870 = vmatpush2.msra.mxu0 0.0
        %871 = vmatprep.subr.mxu0 0.0
        %872 = vmatpush2.msra.mxu0 0.0
        %873 = vmatprep.subr.mxu0 0.0
        %874 = vmatpush2.msra.mxu0 0.0
        %875 = vmatprep.subr.mxu0 0.0
        %876 = vmatpush2.msra.mxu0 0.0
        %877 = vmatprep.subr.mxu0 0.0
        %878 = vmatpush2.msra.mxu0 0.0
        %879 = vmatprep.subr.mxu0 0.0
        %880 = vmatpush2.msra.mxu0 0.0
        %881 = vmatprep.subr.mxu0 0.0
        %882 = vmatpush2.msra.mxu0 0.0
        %883 = vmatprep.subr.mxu0 0.0
        %884 = vmatpush2.msra.mxu0 0.0
        %885 = vmatprep.subr.mxu0 0.0
        %886 = vmatpush2.msra.mxu0 0.0
        %887 = vmatprep.mubr.f32.mxu0 0.0
        %888 = vmatmul.mubr.f32.gmra.mxu0 %v745
        %v889 = vpop.f32.mrf.mxu0
        %v890 = vadd.f32 0.0, %v889
        %v891 = vpop.f32.mrf.mxu0
        %892 = vmatprep.mubr.f32.mxu0 0.0
        %893 = vmatmul.mubr.f32.gmra.mxu0 %v750
        %v894 = vpop.f32.mrf.mxu0
        %v895 = vadd.f32 0.0, %v894
        %v896 = vpop.f32.mrf.mxu0
        %897 = vmatprep.mubr.f32.mxu0 0.0
        %898 = vmatmul.mubr.f32.gmra.mxu0 %v755
        %v899 = vpop.f32.mrf.mxu0
        %v900 = vadd.f32 0.0, %v899
        %v901 = vpop.f32.mrf.mxu0
        %902 = vmatprep.mubr.f32.mxu0 0.0
        %903 = vmatmul.mubr.f32.gmra.mxu0 %v760
        %v904 = vpop.f32.mrf.mxu0
        %v905 = vadd.f32 0.0, %v904
        %v906 = vpop.f32.mrf.mxu0
        %907 = vmatprep.mubr.f32.mxu0 0.0
        %908 = vmatmul.mubr.f32.gmra.mxu0 %v765
        %v909 = vpop.f32.mrf.mxu0
        %v910 = vadd.f32 0.0, %v909
        %v911 = vpop.f32.mrf.mxu0
        %912 = vmatprep.mubr.f32.mxu0 0.0
        %913 = vmatmul.mubr.f32.gmra.mxu0 %v770
        %v914 = vpop.f32.mrf.mxu0
        %v915 = vadd.f32 0.0, %v914
        %v916 = vpop.f32.mrf.mxu0
        %917 = vmatprep.mubr.f32.mxu0 0.0
        %918 = vmatmul.mubr.f32.gmra.mxu0 %v775
        %v919 = vpop.f32.mrf.mxu0
        %v920 = vadd.f32 0.0, %v919
        %v921 = vpop.f32.mrf.mxu0
        %922 = vmatprep.mubr.f32.mxu0 0.0
        %923 = vmatmul.mubr.f32.gmra.mxu0 %v780
        %v924 = vpop.f32.mrf.mxu0
        %v925 = vadd.f32 0.0, %v924
        %v926 = vpop.f32.mrf.mxu0
        %927 = vmatprep.mubr.f32.mxu0 0.0
        %928 = vmatmul.mubr.f32.gmra.mxu0 %v785
        %v929 = vpop.f32.mrf.mxu0
        %v930 = vadd.f32 0.0, %v929
        %v931 = vpop.f32.mrf.mxu0
        %932 = vmatprep.mubr.f32.mxu0 0.0
        %933 = vmatmul.mubr.f32.gmra.mxu0 %v790
        %v934 = vpop.f32.mrf.mxu0
        %v935 = vadd.f32 0.0, %v934
        %v936 = vpop.f32.mrf.mxu0
        %937 = vmatprep.mubr.f32.mxu0 0.0
        %938 = vmatmul.mubr.f32.gmra.mxu0 %v795
        %v939 = vpop.f32.mrf.mxu0
        %v940 = vadd.f32 0.0, %v939
        %v941 = vpop.f32.mrf.mxu0
        %942 = vmatprep.mubr.f32.mxu0 0.0
        %943 = vmatmul.mubr.f32.gmra.mxu0 %v800
        %v944 = vpop.f32.mrf.mxu0
        %v945 = vadd.f32 0.0, %v944
        %v946 = vpop.f32.mrf.mxu0
        %947 = vmatprep.mubr.f32.mxu0 0.0
        %948 = vmatmul.mubr.f32.gmra.mxu0 %v805
        %v949 = vpop.f32.mrf.mxu0
        %v950 = vadd.f32 0.0, %v949
        %v951 = vpop.f32.mrf.mxu0
        %952 = vmatprep.mubr.f32.mxu0 0.0
        %953 = vmatmul.mubr.f32.gmra.mxu0 %v810
        %v954 = vpop.f32.mrf.mxu0
        %v955 = vadd.f32 0.0, %v954
        %v956 = vpop.f32.mrf.mxu0
        %957 = vmatprep.mubr.f32.mxu0 0.0
        %958 = vmatmul.mubr.f32.gmra.mxu0 %v815
        %v959 = vpop.f32.mrf.mxu0
        %v960 = vadd.f32 0.0, %v959
        %v961 = vpop.f32.mrf.mxu0
        %962 = vmatprep.mubr.f32.mxu0 0.0
        %963 = vmatmul.mubr.f32.gmra.mxu0 %v820
        %v964 = vpop.f32.mrf.mxu0
        %v965 = vadd.f32 0.0, %v964
        %v966 = vpop.f32.mrf.mxu0
        %967 = vdwg.mxu0
        %968 = vxpose.xlu0.b32.start [1/16] %v890, 128
        %969 = vxpose.xlu0.b32.cont [2/16] %v895, 128
        %970 = vxpose.xlu0.b32.cont [3/16] %v900, 128
        %971 = vxpose.xlu0.b32.cont [4/16] %v905, 128
        %972 = vxpose.xlu0.b32.cont [5/16] %v910, 128
        %973 = vxpose.xlu0.b32.cont [6/16] %v915, 128
        %974 = vxpose.xlu0.b32.cont [7/16] %v920, 128
        %975 = vxpose.xlu0.b32.cont [8/16] %v925, 128
        %976 = vxpose.xlu0.b32.cont [9/16] %v930, 128
        %977 = vxpose.xlu0.b32.cont [10/16] %v935, 128
        %978 = vxpose.xlu0.b32.cont [11/16] %v940, 128
        %979 = vxpose.xlu0.b32.cont [12/16] %v945, 128
        %980 = vxpose.xlu0.b32.cont [13/16] %v950, 128
        %981 = vxpose.xlu0.b32.cont [14/16] %v955, 128
        %982 = vxpose.xlu0.b32.cont [15/16] %v960, 128
        %983 = vxpose.xlu0.b32.end [16/16] %v965, 128
        %v984 = vpop.trf.xlu0
        %v985 = vpop.trf.xlu0
        %v986 = vpop.trf.xlu0
        %v987 = vpop.trf.xlu0
        %v988 = vpop.trf.xlu0
        %v989 = vpop.trf.xlu0
        %v990 = vpop.trf.xlu0
        %v991 = vpop.trf.xlu0
        %v992 = vpop.trf.xlu0
        %v993 = vpop.trf.xlu0
        %v994 = vpop.trf.xlu0
        %v995 = vpop.trf.xlu0
        %v996 = vpop.trf.xlu0
        %v997 = vpop.trf.xlu0
        %v998 = vpop.trf.xlu0
        %v999 = vpop.trf.xlu0
        %s1000 = scalar_lea.vmem %s272, 128 [#allocation11]
        %1001 = vst [vmem:[%s1000] sm:$0xff] %v984
        %1002 = vst [vmem:[%s1000 + $0x8] sm:$0xff] %v985
        %1003 = vst [vmem:[%s1000 + $0x10] sm:$0xff] %v986
        %1004 = vst [vmem:[%s1000 + $0x18] sm:$0xff] %v987
        %1005 = vst [vmem:[%s1000 + $0x20] sm:$0xff] %v988
        %1006 = vst [vmem:[%s1000 + $0x28] sm:$0xff] %v989
        %1007 = vst [vmem:[%s1000 + $0x30] sm:$0xff] %v990
        %1008 = vst [vmem:[%s1000 + $0x38] sm:$0xff] %v991
        %1009 = vst [vmem:[%s1000 + $0x40] sm:$0xff] %v992
        %1010 = vst [vmem:[%s1000 + $0x48] sm:$0xff] %v993
        %1011 = vst [vmem:[%s1000 + $0x50] sm:$0xff] %v994
        %1012 = vst [vmem:[%s1000 + $0x58] sm:$0xff] %v995
        %1013 = vst [vmem:[%s1000 + $0x60] sm:$0xff] %v996
        %1014 = vst [vmem:[%s1000 + $0x68] sm:$0xff] %v997
        %1015 = vst [vmem:[%s1000 + $0x70] sm:$0xff] %v998
        %1016 = vst [vmem:[%s1000 + $0x78] sm:$0xff] %v999
        %s1017 = sand.u32 %s123, 1
        %s1018 = scalar_lea.sflag [#allocation7], %s1017
        %s1019 = sand.u32 %s123, 1
        %s1020 = smul.addr %s1019, 256
        %s1021 = scalar_lea.vmem [#allocation11], %s1020
        // Predicated region
        $region45: #{tpu_custom_call.1} parent=31 // pred_check
          %p1022 = pneg %p133
        $region46: #{tpu_custom_call.1} parent=31 // pred_check_branch
          %1024 = sbr.rel (%p1022) target = $region48
        $region47: #{tpu_custom_call.1} parent=31 // pred_region
          #allocation15 [shape = 'u32[6]{0}', space=smem, size = 0x18, scoped, tag = 'DMA stride descriptor']
          %s1026 = ssub.s32 4096, 4096
          %1027 = vsyncadd %s1018, %s1026
          %s1028 = smul.addr %s32, 16
          %s1029 = smul.addr %s31, 192
          %s1030 = sadd.s32 %s1028, %s1029
          %s1031 = smul.addr %s1030, 128
          %s1032 = scalar_lea.hbm %s5, %s1031
          %s1034 = sshll.u32 1, 14
          %s1035 = sxor.u32 4294967295, %s1034
          %s1038 = sshll.u32 7, 18
          %s1039 = sxor.u32 4294967295, %s1038
          %s1040 = sand.u32 0, %s1039
          %s1042 = sor.u32 %s1040, 0
          %s1043 = sshll.u32 %s1021, 4
          %s1044 = int_to_ptr.vmem [resolvable:$true] %s1043
          %1050 = sst [smem:[#allocation15]] 2048
          %s1051 = scalar_lea.smem [#allocation15], 1
          %1052 = sst [smem:[%s1051]] 12288
          %s1053 = scalar_lea.smem [#allocation15], 2
          %1054 = sst [smem:[%s1053]] 16
          %s1055 = scalar_lea.smem [#allocation15], 3
          %1056 = sst [smem:[%s1055]] 128
          %s1057 = scalar_lea.smem [#allocation15], 4
          %1058 = sst [smem:[%s1057]] 128
          %s1059 = scalar_lea.smem [#allocation15], 5
          %1060 = sst [smem:[%s1059]] 8
          %1062 = dma.general %s1044, 4096, %s1032, %s1018, 131072, [#allocation15], %s1042, 0
        $region48: #{tpu_custom_call.1} parent=31 // pred_fallthru
          _
      $region32: #{tpu_custom_call.1} parent=5 // pred_fallthru
        _
      %p1063 = scmp.le.s32.totalorder 2, %s22
      // Predicated region
      $region49: #{tpu_custom_call.1} parent=5 // pred_check
        %p1064 = pneg %p1063
      $region50: #{tpu_custom_call.1} parent=5 // pred_check_branch
        %1066 = sbr.rel (%p1064) target = $region52
      $region51: #{tpu_custom_call.1} parent=5 // pred_region
        %s1067 = ssub.s32 %s22, 2
        // Predicated region
        $region53: #{tpu_custom_call.1} parent=51 // pred_check
          %p1068 = pneg %p139
        $region54: #{tpu_custom_call.1} parent=51 // pred_check_branch
          %1070 = sbr.rel (%p1068) target = $region56
        $region55: #{tpu_custom_call.1} parent=51 // pred_region
          %s1071 = sand.u32 %s124, 1
          %s1072 = scalar_lea.sflag [#allocation7], %s1071
          %s1073 = sand.u32 %s124, 1
          %s1074 = smul.addr %s1073, 256
          %s1075 = scalar_lea.vmem [#allocation11], %s1074
          %1076 = dma.done %s1072, 4096
        $region56: #{tpu_custom_call.1} parent=51 // pred_fallthru
          _
      $region52: #{tpu_custom_call.1} parent=5 // pred_fallthru
        _
    $region6: #{tpu_custom_call.1} parent=1 // loop_footer
      %s26 = sadd.s32 1, %s22
    $region7: #{tpu_custom_call.1} parent=1 // loop_footer_branch
      %21 = sbr.rel target = $region3
    $region8: #{tpu_custom_call.1} parent=1 // loop_exit
      _
    %1077 = vsyncpa [#allocation6], 1
    %s1078 = scalar_lea.sflag [#allocation6], 1
    %1079 = vsyncpa %s1078, 1
    %1080 = vsyncpa [#allocation9], 1
    %1081 = vsyncpa [#allocation7], 1
    %s1082 = scalar_lea.sflag [#allocation7], 1
    %1083 = vsyncpa %s1082, 1

</llo_original>
